<compile_context>
chip_gen: v6e
topology: v6e:2x2x1
jax: 0.10.0
libtpu: 0.0.40
codegen_flags: <defaults>
</compile_context>

<pallas_src>
import jax
import jax.numpy as jnp
from jax.experimental import pallas as pl
from jax.experimental.pallas import tpu as pltpu


def _round_up(n, m):
    return ((n + m - 1) // m) * m


def siamese_kernel(x_ref, wb_ref, bb_ref, w1z_ref, w1t_ref, b1_ref,
                   w2t_ref, b2_ref, y_ref):
    # backbone: z = relu(x @ Wb + bb)                              [TB, D]  (f32 accum)
    z = jnp.dot(x_ref[...], wb_ref[...],
                preferred_element_type=jnp.float32) + bb_ref[...]
    z = jnp.maximum(z, 0.0)

    # predictor layer 1 on z (shared part of the z1 / z0 branches) [TB, H1]
    h_base = jnp.dot(z.astype(w1z_ref.dtype), w1z_ref[...],
                     preferred_element_type=jnp.float32) + b1_ref[...]
    # z1 = [z | 1] -> adds the "t" row of W1 once; z0 = [z | 0] -> adds nothing.
    h1 = jnp.maximum(h_base + w1t_ref[...], 0.0)
    h0 = jnp.maximum(h_base, 0.0)
    # TODO(synk): nn.Dropout is identity at inference; training-mode dropout not implemented.

    # predictor layer 2 (out dim = 1): VPU mul + lane reduce instead of an N=1 MXU pass.
    w2t = w2t_ref[...]                                             # (1, H1) f32
    logit1 = jnp.sum(h1 * w2t, axis=-1, keepdims=True) + b2_ref[...]   # (TB, 1)
    logit0 = jnp.sum(h0 * w2t, axis=-1, keepdims=True) + b2_ref[...]   # (TB, 1)

    # merged output block: column 0 = y1, column 1 = y0
    col = jax.lax.broadcasted_iota(jnp.int32, y_ref.shape, 1)
    y_ref[...] = jnp.where(col == 0,
                           jax.nn.sigmoid(logit1),
                           jax.nn.sigmoid(logit0))


def siamese_forward(x_nchw, params, *, block_b=512, interpret=False):
    B = x_nchw.shape[0]
    # NCHW row-major flatten (== torch .view(B, -1)); bf16 halves HBM traffic for x.
    x_flat = x_nchw.reshape(B, -1).astype(jnp.bfloat16)
    f_in = x_flat.shape[1]

    # Stage matmul operands in bf16; biases / tiny tail weight stay f32.
    wb = params["wb"].astype(jnp.bfloat16)        # (f_in, D)
    w1z = params["w1z"].astype(jnp.bfloat16)      # (D, H1)
    bb, w1t, b1, b2 = params["bb"], params["w1t"], params["b1"], params["b2"]
    w2t = params["w2"].T.astype(jnp.float32)      # (1, H1) for the VPU tail layer
    D = wb.shape[1]
    H1 = w1z.shape[1]

    # Batch tile: at least one sublane group (8 rows), at most block_b rows; pad the
    # batch so the tile divides it exactly.
    tb = min(block_b, _round_up(B, 8))
    b_pad = _round_up(B, tb)
    if b_pad != B:
        x_flat = jnp.pad(x_flat, ((0, b_pad - B), (0, 0)))
    grid = (pl.cdiv(b_pad, tb),)

    resident = lambda i: (0, 0)   # same block every grid step -> weights stay in VMEM

    cost = pl.CostEstimate(
        flops=2 * b_pad * (f_in * D + D * H1 + 2 * H1),
        transcendentals=2 * b_pad,                               # two sigmoids per row
        bytes_accessed=(x_flat.size * 2 + wb.size * 2 + w1z.size * 2
                        + (bb.size + w1t.size + b1.size + w2t.size + b2.size) * 4
                        + b_pad * 2 * 4),
    )

    y = pl.pallas_call(
        siamese_kernel,
        out_shape=jax.ShapeDtypeStruct((b_pad, 2), jnp.float32),
        grid=grid,
        in_specs=[
            pl.BlockSpec((tb, f_in), lambda i: (i, 0)),          # x: streamed per batch tile
            pl.BlockSpec((f_in, D), resident),                   # wb
            pl.BlockSpec((1, D), resident),                      # bb
            pl.BlockSpec((D, H1), resident),                     # w1z
            pl.BlockSpec((1, H1), resident),                     # w1t
            pl.BlockSpec((1, H1), resident),                     # b1
            pl.BlockSpec((1, H1), resident),                     # w2t
            pl.BlockSpec((1, 1), resident),                      # b2
        ],
        out_specs=pl.BlockSpec((tb, 2), lambda i: (i, 0)),       # merged [y1 | y0]
        compiler_params=pltpu.CompilerParams(
            dimension_semantics=("parallel",)),                  # batch tiles across TCs (v7x)
        cost_estimate=cost,
        interpret=interpret,
    )(x_flat, wb, bb, w1z, w1t, b1, w2t, b2)

    y = y[:B]
    return {"y1": y[:, 0], "y0": y[:, 1]}


def init_params(key, in_features, feature_dim):
    """Deterministic synthetic parameters (PyTorch-style uniform +/-1/sqrt(fan_in))."""
    h1 = (feature_dim + 1) // 2   # MLP shrink=2 hidden width
    ks = jax.random.split(key, 8)

    def u(k, shape, fan_in):
        bound = 1.0 / jnp.sqrt(jnp.float32(fan_in))
        return jax.random.uniform(k, shape, jnp.float32, -bound, bound)

    # backbone Linear(in_features -> feature_dim)
    wb = u(ks[0], (in_features, feature_dim), in_features)
    bb = u(ks[1], (1, feature_dim), in_features)
    # predictor layer 1: Linear(feature_dim + 1 -> h1), split into z-rows and t-row
    w1 = u(ks[2], (feature_dim + 1, h1), feature_dim + 1)
    b1 = u(ks[3], (1, h1), feature_dim + 1)
    w1z, w1t = w1[:feature_dim, :], w1[feature_dim:feature_dim + 1, :]
    # predictor layer 2: Linear(h1 -> 1)
    w2 = u(ks[4], (h1, 1), h1)
    b2 = u(ks[5], (1, 1), h1)

    return {"wb": wb, "bb": bb, "w1z": w1z, "w1t": w1t, "b1": b1, "w2": w2, "b2": b2}


def reference_forward(x_nchw, params):
    """Pure-JAX f32 reference for sanity checking."""
    B = x_nchw.shape[0]
    x = x_nchw.reshape(B, -1).astype(jnp.float32)
    z = jnp.maximum(x @ params["wb"] + params["bb"], 0.0)
    w1 = jnp.concatenate([params["w1z"], params["w1t"]], axis=0)

    def pred(zc):
        h = jnp.maximum(zc @ w1 + params["b1"], 0.0)
        return jax.nn.sigmoid(h @ params["w2"] + params["b2"])[:, 0]

    ones = jnp.ones((B, 1), jnp.float32)
    zeros = jnp.zeros((B, 1), jnp.float32)
    return {"y1": pred(jnp.concatenate([z, ones], axis=1)),
            "y0": pred(jnp.concatenate([z, zeros], axis=1))}


if __name__ == "__main__":
    B, C, H, W = 2, 4, 16, 16
    feature_dim = 32

    key = jax.random.PRNGKey(0)
    kx, kp = jax.random.split(key)
    x = jax.random.normal(kx, (B, C, H, W), jnp.float32)   # NCHW, like the torch module
    params = init_params(kp, C * H * W, feature_dim)

    out = siamese_forward(x, params)
    jax.block_until_ready(out)

    ref = reference_forward(x, params)
    # bf16-staged matmul operands vs f32 reference -> loosened tolerance.
    assert jnp.allclose(out["y1"], ref["y1"], atol=1e-2, rtol=1e-2)
    assert jnp.allclose(out["y0"], ref["y0"], atol=1e-2, rtol=1e-2)
    assert out["y1"].shape == (B,) and out["y0"].shape == (B,)

    print("KERNEL_OK")
</pallas_src>

<mosaic_0001>
module attributes {stable_mosaic.version = 11 : i64} {
  func.func @siamese_kernel(%arg0: i32, %arg1: memref<8x1024xbf16, #tpu.memory_space<vmem>>, %arg2: memref<1024x32xbf16, #tpu.memory_space<vmem>>, %arg3: memref<1x32xf32, #tpu.memory_space<vmem>>, %arg4: memref<32x16xbf16, #tpu.memory_space<vmem>>, %arg5: memref<1x16xf32, #tpu.memory_space<vmem>>, %arg6: memref<1x16xf32, #tpu.memory_space<vmem>>, %arg7: memref<1x16xf32, #tpu.memory_space<vmem>>, %arg8: memref<1x1xf32, #tpu.memory_space<vmem>>, %arg9: memref<8x2xf32, #tpu.memory_space<vmem>>) attributes {dimension_semantics = [#tpu.dimension_semantics<parallel>], iteration_bounds = array<i64: 1>, scalar_prefetch = 0 : i64, scratch_operands = 0 : i64, tpu.core_type = #tpu.core_type<tc>, window_params = [{transform_indices = @transform_0, window_bounds = array<i64: 8, 1024>}, {pipeline_mode = #tpu.pipeline_mode<synchronous>, transform_indices = @transform_1, window_bounds = array<i64: 1024, 32>}, {pipeline_mode = #tpu.pipeline_mode<synchronous>, transform_indices = @transform_2, window_bounds = array<i64: 1, 32>}, {pipeline_mode = #tpu.pipeline_mode<synchronous>, transform_indices = @transform_3, window_bounds = array<i64: 32, 16>}, {pipeline_mode = #tpu.pipeline_mode<synchronous>, transform_indices = @transform_4, window_bounds = array<i64: 1, 16>}, {pipeline_mode = #tpu.pipeline_mode<synchronous>, transform_indices = @transform_5, window_bounds = array<i64: 1, 16>}, {pipeline_mode = #tpu.pipeline_mode<synchronous>, transform_indices = @transform_6, window_bounds = array<i64: 1, 16>}, {pipeline_mode = #tpu.pipeline_mode<synchronous>, transform_indices = @transform_7, window_bounds = array<i64: 1, 1>}, {transform_indices = @transform_8, window_bounds = array<i64: 8, 2>}]} {
    %c0 = arith.constant 0 : index
    %c0_0 = arith.constant 0 : index
    %0 = vector.load %arg1[%c0, %c0_0] : memref<8x1024xbf16, #tpu.memory_space<vmem>>, vector<8x1024xbf16>
    %c0_1 = arith.constant 0 : index
    %c0_2 = arith.constant 0 : index
    %1 = vector.load %arg2[%c0_1, %c0_2] : memref<1024x32xbf16, #tpu.memory_space<vmem>>, vector<1024x32xbf16>
    %cst = arith.constant dense<0.000000e+00> : vector<8x32xf32>
    %2 = tpu.matmul %0, %1, %cst {dimension_numbers = #tpu.dot_dimension_numbers<[1], [0], [0], [1], [0, 0, 1, 1], [], []>} : vector<8x1024xbf16>, vector<1024x32xbf16>, vector<8x32xf32> -> vector<8x32xf32>
    %c0_3 = arith.constant 0 : index
    %c0_4 = arith.constant 0 : index
    %3 = vector.load %arg3[%c0_3, %c0_4] : memref<1x32xf32, #tpu.memory_space<vmem>>, vector<1x32xf32>
    %4 = vector.broadcast %3 : vector<1x32xf32> to vector<8x32xf32>
    %5 = arith.addf %2, %4 : vector<8x32xf32>
    %cst_5 = arith.constant 0.000000e+00 : f32
    %6 = vector.broadcast %cst_5 : f32 to vector<8x32xf32>
    %7 = arith.maximumf %5, %6 : vector<8x32xf32>
    %8 = arith.truncf %7 : vector<8x32xf32> to vector<8x32xbf16>
    %c0_6 = arith.constant 0 : index
    %c0_7 = arith.constant 0 : index
    %9 = vector.load %arg4[%c0_6, %c0_7] : memref<32x16xbf16, #tpu.memory_space<vmem>>, vector<32x16xbf16>
    %cst_8 = arith.constant dense<0.000000e+00> : vector<8x16xf32>
    %10 = tpu.matmul %8, %9, %cst_8 {dimension_numbers = #tpu.dot_dimension_numbers<[1], [0], [0], [1], [0, 0, 1, 1], [], []>} : vector<8x32xbf16>, vector<32x16xbf16>, vector<8x16xf32> -> vector<8x16xf32>
    %c0_9 = arith.constant 0 : index
    %c0_10 = arith.constant 0 : index
    %11 = vector.load %arg6[%c0_9, %c0_10] : memref<1x16xf32, #tpu.memory_space<vmem>>, vector<1x16xf32>
    %12 = vector.broadcast %11 : vector<1x16xf32> to vector<8x16xf32>
    %13 = arith.addf %10, %12 : vector<8x16xf32>
    %c0_11 = arith.constant 0 : index
    %c0_12 = arith.constant 0 : index
    %14 = vector.load %arg5[%c0_11, %c0_12] : memref<1x16xf32, #tpu.memory_space<vmem>>, vector<1x16xf32>
    %15 = vector.broadcast %14 : vector<1x16xf32> to vector<8x16xf32>
    %16 = arith.addf %13, %15 : vector<8x16xf32>
    %cst_13 = arith.constant 0.000000e+00 : f32
    %17 = vector.broadcast %cst_13 : f32 to vector<8x16xf32>
    %18 = arith.maximumf %16, %17 : vector<8x16xf32>
    %cst_14 = arith.constant 0.000000e+00 : f32
    %19 = vector.broadcast %cst_14 : f32 to vector<8x16xf32>
    %20 = arith.maximumf %13, %19 : vector<8x16xf32>
    %c0_15 = arith.constant 0 : index
    %c0_16 = arith.constant 0 : index
    %21 = vector.load %arg7[%c0_15, %c0_16] : memref<1x16xf32, #tpu.memory_space<vmem>>, vector<1x16xf32>
    %22 = vector.broadcast %21 : vector<1x16xf32> to vector<8x16xf32>
    %23 = arith.mulf %18, %22 : vector<8x16xf32>
    %cst_17 = arith.constant dense<0.000000e+00> : vector<8xf32>
    %24 = vector.multi_reduction <add>, %23, %cst_17 [1] : vector<8x16xf32> to vector<8xf32>
    %25 = vector.shape_cast %24 : vector<8xf32> to vector<8x1xf32>
    %c0_18 = arith.constant 0 : index
    %c0_19 = arith.constant 0 : index
    %26 = vector.load %arg8[%c0_18, %c0_19] : memref<1x1xf32, #tpu.memory_space<vmem>>, vector<1x1xf32>
    %27 = vector.broadcast %26 : vector<1x1xf32> to vector<8x1xf32>
    %28 = arith.addf %25, %27 : vector<8x1xf32>
    %29 = vector.broadcast %21 : vector<1x16xf32> to vector<8x16xf32>
    %30 = arith.mulf %20, %29 : vector<8x16xf32>
    %cst_20 = arith.constant dense<0.000000e+00> : vector<8xf32>
    %31 = vector.multi_reduction <add>, %30, %cst_20 [1] : vector<8x16xf32> to vector<8xf32>
    %32 = vector.shape_cast %31 : vector<8xf32> to vector<8x1xf32>
    %c0_21 = arith.constant 0 : index
    %c0_22 = arith.constant 0 : index
    %33 = vector.load %arg8[%c0_21, %c0_22] : memref<1x1xf32, #tpu.memory_space<vmem>>, vector<1x1xf32>
    %34 = vector.broadcast %33 : vector<1x1xf32> to vector<8x1xf32>
    %35 = arith.addf %32, %34 : vector<8x1xf32>
    %36 = tpu.iota {dimensions = array<i32: 1>} : vector<8x2xi32>
    %c0_i32 = arith.constant 0 : i32
    %37 = vector.broadcast %c0_i32 : i32 to vector<8x2xi32>
    %38 = arith.cmpi eq, %36, %37 : vector<8x2xi32>
    %39 = arith.negf %28 : vector<8x1xf32>
    %40 = math.exp %39 : vector<8x1xf32>
    %cst_23 = arith.constant 1.000000e+00 : f32
    %41 = vector.broadcast %cst_23 : f32 to vector<8x1xf32>
    %42 = arith.addf %41, %40 : vector<8x1xf32>
    %43 = arith.divf %41, %42 : vector<8x1xf32>
    %44 = arith.negf %35 : vector<8x1xf32>
    %45 = math.exp %44 : vector<8x1xf32>
    %cst_24 = arith.constant 1.000000e+00 : f32
    %46 = vector.broadcast %cst_24 : f32 to vector<8x1xf32>
    %47 = arith.addf %46, %45 : vector<8x1xf32>
    %48 = arith.divf %46, %47 : vector<8x1xf32>
    %49 = vector.shape_cast %43 : vector<8x1xf32> to vector<8x1xf32>
    %50 = vector.broadcast %49 : vector<8x1xf32> to vector<8x2xf32>
    %51 = vector.shape_cast %48 : vector<8x1xf32> to vector<8x1xf32>
    %52 = vector.broadcast %51 : vector<8x1xf32> to vector<8x2xf32>
    %53 = arith.select %38, %50, %52 : vector<8x2xi1>, vector<8x2xf32>
    %c0_25 = arith.constant 0 : index
    %c0_26 = arith.constant 0 : index
    %54 = vector.load %arg9[%c0_25, %c0_26] : memref<8x2xf32, #tpu.memory_space<vmem>>, vector<8x2xf32>
    tpu.vector_store %arg9[%c0_25, %c0_26], %53 {strides = array<i32>} : memref<8x2xf32, #tpu.memory_space<vmem>>, vector<8x2xf32>,
    return
  }
  func.func @transform_0(%arg0: i32) -> (i32, i32) {
    %c0_i32 = arith.constant 0 : i32
    %c0_i32_0 = arith.constant 0 : i32
    return %arg0, %c0_i32 : i32, i32
  }
  func.func @transform_1(%arg0: i32) -> (i32, i32) {
    %c0_i32 = arith.constant 0 : i32
    %c0_i32_0 = arith.constant 0 : i32
    %c0_i32_1 = arith.constant 0 : i32
    return %c0_i32, %c0_i32_0 : i32, i32
  }
  func.func @transform_2(%arg0: i32) -> (i32, i32) {
    %c0_i32 = arith.constant 0 : i32
    %c0_i32_0 = arith.constant 0 : i32
    %c0_i32_1 = arith.constant 0 : i32
    return %c0_i32, %c0_i32_0 : i32, i32
  }
  func.func @transform_3(%arg0: i32) -> (i32, i32) {
    %c0_i32 = arith.constant 0 : i32
    %c0_i32_0 = arith.constant 0 : i32
    %c0_i32_1 = arith.constant 0 : i32
    return %c0_i32, %c0_i32_0 : i32, i32
  }
  func.func @transform_4(%arg0: i32) -> (i32, i32) {
    %c0_i32 = arith.constant 0 : i32
    %c0_i32_0 = arith.constant 0 : i32
    %c0_i32_1 = arith.constant 0 : i32
    return %c0_i32, %c0_i32_0 : i32, i32
  }
  func.func @transform_5(%arg0: i32) -> (i32, i32) {
    %c0_i32 = arith.constant 0 : i32
    %c0_i32_0 = arith.constant 0 : i32
    %c0_i32_1 = arith.constant 0 : i32
    return %c0_i32, %c0_i32_0 : i32, i32
  }
  func.func @transform_6(%arg0: i32) -> (i32, i32) {
    %c0_i32 = arith.constant 0 : i32
    %c0_i32_0 = arith.constant 0 : i32
    %c0_i32_1 = arith.constant 0 : i32
    return %c0_i32, %c0_i32_0 : i32, i32
  }
  func.func @transform_7(%arg0: i32) -> (i32, i32) {
    %c0_i32 = arith.constant 0 : i32
    %c0_i32_0 = arith.constant 0 : i32
    %c0_i32_1 = arith.constant 0 : i32
    return %c0_i32, %c0_i32_0 : i32, i32
  }
  func.func @transform_8(%arg0: i32) -> (i32, i32) {
    %c0_i32 = arith.constant 0 : i32
    %c0_i32_0 = arith.constant 0 : i32
    return %arg0, %c0_i32 : i32, i32
  }
}

</mosaic_0001>

<llo_original>
// kernel: tpu_custom_call.1
$region0: #{tpu_custom_call.1}
  #allocation0 [shape = 'u32[]', space=smem, size = 0x4, offset = 0x4, fixed_abs, tag = 'smem constant byte address 0x4 - core index']
  #allocation1 [shape = 'u32[144,128]{1,0:T(1,128)}', space=vmem, size = 0x12000, scoped, tag = 'internal scratch']
  #allocation2 [shape = 'f32[1,1]{1,0:T(1,128)S(1)}', space=vmem, size = 0x200, scoped, tag = 'scoped memory for tpu_custom_call.1']
  %s0 = inlined_call_operand.vmem [shape: bf16[8,1024], index: 0, kind: input, shape index: {}]
  %s1 = inlined_call_operand.vmem [shape: bf16[1024,32], index: 1, kind: input, shape index: {}]
  %s2 = inlined_call_operand.vmem [shape: f32[1,32], index: 2, kind: input, shape index: {}]
  %s3 = inlined_call_operand.vmem [shape: bf16[32,16], index: 3, kind: input, shape index: {}]
  %s4 = inlined_call_operand.vmem [shape: f32[1,16], index: 4, kind: input, shape index: {}]
  %s5 = inlined_call_operand.vmem [shape: f32[1,16], index: 5, kind: input, shape index: {}]
  %s6 = inlined_call_operand.vmem [shape: f32[1,16], index: 6, kind: input, shape index: {}]
  %s7 = inlined_call_operand.<no memory space> [shape: f32[1,1], index: 7, kind: input, shape index: {}]
  %s8 = inlined_call_operand.vmem [shape: f32[8,2], index: 8, kind: output, shape index: {}]
  %s9 = sld [smem:[#allocation0]]
  $region42: #{tpu_custom_call.1} parent=0
    _
  %s11 = ssub.s32 1, %s9
  %s12 = scalar_select 0, %s11, %s9
  %v13 = vstv %s7
  %14 = vst [vmem:[#allocation2] sm:$0x1] %v13
  // Predicated region
  $region2: #{tpu_custom_call.1} parent=0 // pred_check
    _
  $region3: #{tpu_custom_call.1} parent=0 // pred_check_branch
    %16 = sbr.rel (0) target = $region5
  $region4: #{tpu_custom_call.1} parent=0 // pred_region
    _
  $region5: #{tpu_custom_call.1} parent=0 // pred_fallthru
    _
  // Predicated region
  $region6: #{tpu_custom_call.1} parent=0 // pred_check
    _
  $region7: #{tpu_custom_call.1} parent=0 // pred_check_branch
    %18 = sbr.rel (0) target = $region9
  $region8: #{tpu_custom_call.1} parent=0 // pred_region
    _
  $region9: #{tpu_custom_call.1} parent=0 // pred_fallthru
    _
  // Predicated region
  $region10: #{tpu_custom_call.1} parent=0 // pred_check
    _
  $region11: #{tpu_custom_call.1} parent=0 // pred_check_branch
    %20 = sbr.rel (0) target = $region13
  $region12: #{tpu_custom_call.1} parent=0 // pred_region
    _
  $region13: #{tpu_custom_call.1} parent=0 // pred_fallthru
    _
  // Predicated region
  $region14: #{tpu_custom_call.1} parent=0 // pred_check
    _
  $region15: #{tpu_custom_call.1} parent=0 // pred_check_branch
    %22 = sbr.rel (0) target = $region17
  $region16: #{tpu_custom_call.1} parent=0 // pred_region
    _
  $region17: #{tpu_custom_call.1} parent=0 // pred_fallthru
    _
  // Predicated region
  $region18: #{tpu_custom_call.1} parent=0 // pred_check
    _
  $region19: #{tpu_custom_call.1} parent=0 // pred_check_branch
    %24 = sbr.rel (0) target = $region21
  $region20: #{tpu_custom_call.1} parent=0 // pred_region
    _
  $region21: #{tpu_custom_call.1} parent=0 // pred_fallthru
    _
  // Predicated region
  $region22: #{tpu_custom_call.1} parent=0 // pred_check
    _
  $region23: #{tpu_custom_call.1} parent=0 // pred_check_branch
    %26 = sbr.rel (0) target = $region25
  $region24: #{tpu_custom_call.1} parent=0 // pred_region
    _
  $region25: #{tpu_custom_call.1} parent=0 // pred_fallthru
    _
  // Predicated region
  $region26: #{tpu_custom_call.1} parent=0 // pred_check
    _
  $region27: #{tpu_custom_call.1} parent=0 // pred_check_branch
    %28 = sbr.rel (0) target = $region29
  $region28: #{tpu_custom_call.1} parent=0 // pred_region
    _
  $region29: #{tpu_custom_call.1} parent=0 // pred_fallthru
    _
  // Predicated region
  $region30: #{tpu_custom_call.1} parent=0 // pred_check
    _
  $region31: #{tpu_custom_call.1} parent=0 // pred_check_branch
    %30 = sbr.rel (0) target = $region33
  $region32: #{tpu_custom_call.1} parent=0 // pred_region
    _
  $region33: #{tpu_custom_call.1} parent=0 // pred_fallthru
    _
  %v32 = vld [vmem:[%s0] sm:$0xff]
  %v33 = vld [vmem:[%s0 + $0x8] sm:$0xff]
  %v34 = vld [vmem:[%s0 + $0x10] sm:$0xff]
  %v35 = vld [vmem:[%s0 + $0x18] sm:$0xff]
  %v36 = vld [vmem:[%s1] sm:$0xf]
  %v37 = vld [vmem:[%s1 + $0x4] sm:$0xf]
  %v38 = vld [vmem:[%s1 + $0x8] sm:$0xf]
  %v39 = vld [vmem:[%s1 + $0xc] sm:$0xf]
  %v40 = vld [vmem:[%s1 + $0x10] sm:$0xf]
  %v41 = vld [vmem:[%s1 + $0x14] sm:$0xf]
  %v42 = vld [vmem:[%s1 + $0x18] sm:$0xf]
  %v43 = vld [vmem:[%s1 + $0x1c] sm:$0xf]
  %v44 = vld [vmem:[%s1 + $0x20] sm:$0xf]
  %v45 = vld [vmem:[%s1 + $0x24] sm:$0xf]
  %v46 = vld [vmem:[%s1 + $0x28] sm:$0xf]
  %v47 = vld [vmem:[%s1 + $0x2c] sm:$0xf]
  %v48 = vld [vmem:[%s1 + $0x30] sm:$0xf]
  %v49 = vld [vmem:[%s1 + $0x34] sm:$0xf]
  %v50 = vld [vmem:[%s1 + $0x38] sm:$0xf]
  %v51 = vld [vmem:[%s1 + $0x3c] sm:$0xf]
  %v52 = vld [vmem:[%s1 + $0x40] sm:$0xf]
  %v53 = vld [vmem:[%s1 + $0x44] sm:$0xf]
  %v54 = vld [vmem:[%s1 + $0x48] sm:$0xf]
  %v55 = vld [vmem:[%s1 + $0x4c] sm:$0xf]
  %v56 = vld [vmem:[%s1 + $0x50] sm:$0xf]
  %v57 = vld [vmem:[%s1 + $0x54] sm:$0xf]
  %v58 = vld [vmem:[%s1 + $0x58] sm:$0xf]
  %v59 = vld [vmem:[%s1 + $0x5c] sm:$0xf]
  %v60 = vld [vmem:[%s1 + $0x60] sm:$0xf]
  %v61 = vld [vmem:[%s1 + $0x64] sm:$0xf]
  %v62 = vld [vmem:[%s1 + $0x68] sm:$0xf]
  %v63 = vld [vmem:[%s1 + $0x6c] sm:$0xf]
  %v64 = vld [vmem:[%s1 + $0x70] sm:$0xf]
  %v65 = vld [vmem:[%s1 + $0x74] sm:$0xf]
  %v66 = vld [vmem:[%s1 + $0x78] sm:$0xf]
  %v67 = vld [vmem:[%s1 + $0x7c] sm:$0xf]
  %v68 = vld [vmem:[%s1 + $0x80] sm:$0xf]
  %v69 = vld [vmem:[%s1 + $0x84] sm:$0xf]
  %v70 = vld [vmem:[%s1 + $0x88] sm:$0xf]
  %v71 = vld [vmem:[%s1 + $0x8c] sm:$0xf]
  %v72 = vld [vmem:[%s1 + $0x90] sm:$0xf]
  %v73 = vld [vmem:[%s1 + $0x94] sm:$0xf]
  %v74 = vld [vmem:[%s1 + $0x98] sm:$0xf]
  %v75 = vld [vmem:[%s1 + $0x9c] sm:$0xf]
  %v76 = vld [vmem:[%s1 + $0xa0] sm:$0xf]
  %v77 = vld [vmem:[%s1 + $0xa4] sm:$0xf]
  %v78 = vld [vmem:[%s1 + $0xa8] sm:$0xf]
  %v79 = vld [vmem:[%s1 + $0xac] sm:$0xf]
  %v80 = vld [vmem:[%s1 + $0xb0] sm:$0xf]
  %v81 = vld [vmem:[%s1 + $0xb4] sm:$0xf]
  %v82 = vld [vmem:[%s1 + $0xb8] sm:$0xf]
  %v83 = vld [vmem:[%s1 + $0xbc] sm:$0xf]
  %v84 = vld [vmem:[%s1 + $0xc0] sm:$0xf]
  %v85 = vld [vmem:[%s1 + $0xc4] sm:$0xf]
  %v86 = vld [vmem:[%s1 + $0xc8] sm:$0xf]
  %v87 = vld [vmem:[%s1 + $0xcc] sm:$0xf]
  %v88 = vld [vmem:[%s1 + $0xd0] sm:$0xf]
  %v89 = vld [vmem:[%s1 + $0xd4] sm:$0xf]
  %v90 = vld [vmem:[%s1 + $0xd8] sm:$0xf]
  %v91 = vld [vmem:[%s1 + $0xdc] sm:$0xf]
  %v92 = vld [vmem:[%s1 + $0xe0] sm:$0xf]
  %v93 = vld [vmem:[%s1 + $0xe4] sm:$0xf]
  %v94 = vld [vmem:[%s1 + $0xe8] sm:$0xf]
  %v95 = vld [vmem:[%s1 + $0xec] sm:$0xf]
  %v96 = vld [vmem:[%s1 + $0xf0] sm:$0xf]
  %v97 = vld [vmem:[%s1 + $0xf4] sm:$0xf]
  %v98 = vld [vmem:[%s1 + $0xf8] sm:$0xf]
  %v99 = vld [vmem:[%s1 + $0xfc] sm:$0xf]
  %v100 = vld [vmem:[%s1 + $0x100] sm:$0xf]
  %v101 = vld [vmem:[%s1 + $0x104] sm:$0xf]
  %v102 = vld [vmem:[%s1 + $0x108] sm:$0xf]
  %v103 = vld [vmem:[%s1 + $0x10c] sm:$0xf]
  %v104 = vld [vmem:[%s1 + $0x110] sm:$0xf]
  %v105 = vld [vmem:[%s1 + $0x114] sm:$0xf]
  %v106 = vld [vmem:[%s1 + $0x118] sm:$0xf]
  %v107 = vld [vmem:[%s1 + $0x11c] sm:$0xf]
  %v108 = vld [vmem:[%s1 + $0x120] sm:$0xf]
  %v109 = vld [vmem:[%s1 + $0x124] sm:$0xf]
  %v110 = vld [vmem:[%s1 + $0x128] sm:$0xf]
  %v111 = vld [vmem:[%s1 + $0x12c] sm:$0xf]
  %v112 = vld [vmem:[%s1 + $0x130] sm:$0xf]
  %v113 = vld [vmem:[%s1 + $0x134] sm:$0xf]
  %v114 = vld [vmem:[%s1 + $0x138] sm:$0xf]
  %v115 = vld [vmem:[%s1 + $0x13c] sm:$0xf]
  %v116 = vld [vmem:[%s1 + $0x140] sm:$0xf]
  %v117 = vld [vmem:[%s1 + $0x144] sm:$0xf]
  %v118 = vld [vmem:[%s1 + $0x148] sm:$0xf]
  %v119 = vld [vmem:[%s1 + $0x14c] sm:$0xf]
  %v120 = vld [vmem:[%s1 + $0x150] sm:$0xf]
  %v121 = vld [vmem:[%s1 + $0x154] sm:$0xf]
  %v122 = vld [vmem:[%s1 + $0x158] sm:$0xf]
  %v123 = vld [vmem:[%s1 + $0x15c] sm:$0xf]
  %v124 = vld [vmem:[%s1 + $0x160] sm:$0xf]
  %v125 = vld [vmem:[%s1 + $0x164] sm:$0xf]
  %v126 = vld [vmem:[%s1 + $0x168] sm:$0xf]
  %v127 = vld [vmem:[%s1 + $0x16c] sm:$0xf]
  %v128 = vld [vmem:[%s1 + $0x170] sm:$0xf]
  %v129 = vld [vmem:[%s1 + $0x174] sm:$0xf]
  %v130 = vld [vmem:[%s1 + $0x178] sm:$0xf]
  %v131 = vld [vmem:[%s1 + $0x17c] sm:$0xf]
  %v132 = vld [vmem:[%s1 + $0x180] sm:$0xf]
  %v133 = vld [vmem:[%s1 + $0x184] sm:$0xf]
  %v134 = vld [vmem:[%s1 + $0x188] sm:$0xf]
  %v135 = vld [vmem:[%s1 + $0x18c] sm:$0xf]
  %v136 = vld [vmem:[%s1 + $0x190] sm:$0xf]
  %v137 = vld [vmem:[%s1 + $0x194] sm:$0xf]
  %v138 = vld [vmem:[%s1 + $0x198] sm:$0xf]
  %v139 = vld [vmem:[%s1 + $0x19c] sm:$0xf]
  %v140 = vld [vmem:[%s1 + $0x1a0] sm:$0xf]
  %v141 = vld [vmem:[%s1 + $0x1a4] sm:$0xf]
  %v142 = vld [vmem:[%s1 + $0x1a8] sm:$0xf]
  %v143 = vld [vmem:[%s1 + $0x1ac] sm:$0xf]
  %v144 = vld [vmem:[%s1 + $0x1b0] sm:$0xf]
  %v145 = vld [vmem:[%s1 + $0x1b4] sm:$0xf]
  %v146 = vld [vmem:[%s1 + $0x1b8] sm:$0xf]
  %v147 = vld [vmem:[%s1 + $0x1bc] sm:$0xf]
  %v148 = vld [vmem:[%s1 + $0x1c0] sm:$0xf]
  %v149 = vld [vmem:[%s1 + $0x1c4] sm:$0xf]
  %v150 = vld [vmem:[%s1 + $0x1c8] sm:$0xf]
  %v151 = vld [vmem:[%s1 + $0x1cc] sm:$0xf]
  %v152 = vld [vmem:[%s1 + $0x1d0] sm:$0xf]
  %v153 = vld [vmem:[%s1 + $0x1d4] sm:$0xf]
  %v154 = vld [vmem:[%s1 + $0x1d8] sm:$0xf]
  %v155 = vld [vmem:[%s1 + $0x1dc] sm:$0xf]
  %v156 = vld [vmem:[%s1 + $0x1e0] sm:$0xf]
  %v157 = vld [vmem:[%s1 + $0x1e4] sm:$0xf]
  %v158 = vld [vmem:[%s1 + $0x1e8] sm:$0xf]
  %v159 = vld [vmem:[%s1 + $0x1ec] sm:$0xf]
  %v160 = vld [vmem:[%s1 + $0x1f0] sm:$0xf]
  %v161 = vld [vmem:[%s1 + $0x1f4] sm:$0xf]
  %v162 = vld [vmem:[%s1 + $0x1f8] sm:$0xf]
  %v163 = vld [vmem:[%s1 + $0x1fc] sm:$0xf]
  %v164 = vld [vmem:[%s2] sm:$0x1]
  %v166 = vlaneseq
  %v167 = vshrl.u32 %v166, 7
  %v168 = vsub.s32 0, %v167
  %v169 = vrot.slane %v164, %v168
  %v175 = vunpack.c.l.b16 %v32
  %v176 = vunpack.c.h.b16 %v32
  %v177 = vunpack.c.l.b16 %v33
  %v178 = vunpack.c.h.b16 %v33
  %v179 = vunpack.c.l.b16 %v34
  %v180 = vunpack.c.h.b16 %v34
  %v181 = vunpack.c.l.b16 %v35
  %v182 = vunpack.c.h.b16 %v35
  %v183 = vpack.c.b16 %v175, %v175
  %v184 = vpack.c.b16 %v176, %v176
  %v185 = vpack.c.b16 %v177, %v177
  %v186 = vpack.c.b16 %v178, %v178
  %v187 = vpack.c.b16 %v179, %v179
  %v188 = vpack.c.b16 %v180, %v180
  %v189 = vpack.c.b16 %v181, %v181
  %v190 = vpack.c.b16 %v182, %v182
  %v327 = vunpack.c.l.b16 %v36
  %v328 = vunpack.c.l.b16 %v37
  %v329 = vunpack.c.l.b16 %v38
  %v330 = vunpack.c.l.b16 %v39
  %v331 = vunpack.c.l.b16 %v40
  %v332 = vunpack.c.l.b16 %v41
  %v333 = vunpack.c.l.b16 %v42
  %v334 = vunpack.c.l.b16 %v43
  %v335 = vunpack.c.l.b16 %v44
  %v336 = vunpack.c.l.b16 %v45
  %v337 = vunpack.c.l.b16 %v46
  %v338 = vunpack.c.l.b16 %v47
  %v339 = vunpack.c.l.b16 %v48
  %v340 = vunpack.c.l.b16 %v49
  %v341 = vunpack.c.l.b16 %v50
  %v342 = vunpack.c.l.b16 %v51
  %v343 = vunpack.c.l.b16 %v52
  %v344 = vunpack.c.l.b16 %v53
  %v345 = vunpack.c.l.b16 %v54
  %v346 = vunpack.c.l.b16 %v55
  %v347 = vunpack.c.l.b16 %v56
  %v348 = vunpack.c.l.b16 %v57
  %v349 = vunpack.c.l.b16 %v58
  %v350 = vunpack.c.l.b16 %v59
  %v351 = vunpack.c.l.b16 %v60
  %v352 = vunpack.c.l.b16 %v61
  %v353 = vunpack.c.l.b16 %v62
  %v354 = vunpack.c.l.b16 %v63
  %v355 = vunpack.c.l.b16 %v64
  %v356 = vunpack.c.l.b16 %v65
  %v357 = vunpack.c.l.b16 %v66
  %v358 = vunpack.c.l.b16 %v67
  %v359 = vunpack.c.l.b16 %v68
  %v360 = vunpack.c.l.b16 %v69
  %v361 = vunpack.c.l.b16 %v70
  %v362 = vunpack.c.l.b16 %v71
  %v363 = vunpack.c.l.b16 %v72
  %v364 = vunpack.c.l.b16 %v73
  %v365 = vunpack.c.l.b16 %v74
  %v366 = vunpack.c.l.b16 %v75
  %v367 = vunpack.c.l.b16 %v76
  %v368 = vunpack.c.l.b16 %v77
  %v369 = vunpack.c.l.b16 %v78
  %v370 = vunpack.c.l.b16 %v79
  %v371 = vunpack.c.l.b16 %v80
  %v372 = vunpack.c.l.b16 %v81
  %v373 = vunpack.c.l.b16 %v82
  %v374 = vunpack.c.l.b16 %v83
  %v375 = vunpack.c.l.b16 %v84
  %v376 = vunpack.c.l.b16 %v85
  %v377 = vunpack.c.l.b16 %v86
  %v378 = vunpack.c.l.b16 %v87
  %v379 = vunpack.c.l.b16 %v88
  %v380 = vunpack.c.l.b16 %v89
  %v381 = vunpack.c.l.b16 %v90
  %v382 = vunpack.c.l.b16 %v91
  %v383 = vunpack.c.l.b16 %v92
  %v384 = vunpack.c.l.b16 %v93
  %v385 = vunpack.c.l.b16 %v94
  %v386 = vunpack.c.l.b16 %v95
  %v387 = vunpack.c.l.b16 %v96
  %v388 = vunpack.c.l.b16 %v97
  %v389 = vunpack.c.l.b16 %v98
  %v390 = vunpack.c.l.b16 %v99
  %v391 = vunpack.c.l.b16 %v100
  %v392 = vunpack.c.l.b16 %v101
  %v393 = vunpack.c.l.b16 %v102
  %v394 = vunpack.c.l.b16 %v103
  %v395 = vunpack.c.l.b16 %v104
  %v396 = vunpack.c.l.b16 %v105
  %v397 = vunpack.c.l.b16 %v106
  %v398 = vunpack.c.l.b16 %v107
  %v399 = vunpack.c.l.b16 %v108
  %v400 = vunpack.c.l.b16 %v109
  %v401 = vunpack.c.l.b16 %v110
  %v402 = vunpack.c.l.b16 %v111
  %v403 = vunpack.c.l.b16 %v112
  %v404 = vunpack.c.l.b16 %v113
  %v405 = vunpack.c.l.b16 %v114
  %v406 = vunpack.c.l.b16 %v115
  %v407 = vunpack.c.l.b16 %v116
  %v408 = vunpack.c.l.b16 %v117
  %v409 = vunpack.c.l.b16 %v118
  %v410 = vunpack.c.l.b16 %v119
  %v411 = vunpack.c.l.b16 %v120
  %v412 = vunpack.c.l.b16 %v121
  %v413 = vunpack.c.l.b16 %v122
  %v414 = vunpack.c.l.b16 %v123
  %v415 = vunpack.c.l.b16 %v124
  %v416 = vunpack.c.l.b16 %v125
  %v417 = vunpack.c.l.b16 %v126
  %v418 = vunpack.c.l.b16 %v127
  %v419 = vunpack.c.l.b16 %v128
  %v420 = vunpack.c.l.b16 %v129
  %v421 = vunpack.c.l.b16 %v130
  %v422 = vunpack.c.l.b16 %v131
  %v423 = vunpack.c.l.b16 %v132
  %v424 = vunpack.c.l.b16 %v133
  %v425 = vunpack.c.l.b16 %v134
  %v426 = vunpack.c.l.b16 %v135
  %v427 = vunpack.c.l.b16 %v136
  %v428 = vunpack.c.l.b16 %v137
  %v429 = vunpack.c.l.b16 %v138
  %v430 = vunpack.c.l.b16 %v139
  %v431 = vunpack.c.l.b16 %v140
  %v432 = vunpack.c.l.b16 %v141
  %v433 = vunpack.c.l.b16 %v142
  %v434 = vunpack.c.l.b16 %v143
  %v435 = vunpack.c.l.b16 %v144
  %v436 = vunpack.c.l.b16 %v145
  %v437 = vunpack.c.l.b16 %v146
  %v438 = vunpack.c.l.b16 %v147
  %v439 = vunpack.c.l.b16 %v148
  %v440 = vunpack.c.l.b16 %v149
  %v441 = vunpack.c.l.b16 %v150
  %v442 = vunpack.c.l.b16 %v151
  %v443 = vunpack.c.l.b16 %v152
  %v444 = vunpack.c.l.b16 %v153
  %v445 = vunpack.c.l.b16 %v154
  %v446 = vunpack.c.l.b16 %v155
  %v447 = vunpack.c.l.b16 %v156
  %v448 = vunpack.c.l.b16 %v157
  %v449 = vunpack.c.l.b16 %v158
  %v450 = vunpack.c.l.b16 %v159
  %v451 = vunpack.c.l.b16 %v160
  %v452 = vunpack.c.l.b16 %v161
  %v453 = vunpack.c.l.b16 %v162
  %v454 = vunpack.c.l.b16 %v163
  %v455 = vpack.c.b16 %v328, %v327
  %v456 = vpack.c.b16 %v330, %v329
  %v457 = vpack.c.b16 %v332, %v331
  %v458 = vpack.c.b16 %v334, %v333
  %v459 = vpack.c.b16 %v336, %v335
  %v460 = vpack.c.b16 %v338, %v337
  %v461 = vpack.c.b16 %v340, %v339
  %v462 = vpack.c.b16 %v342, %v341
  %v463 = vpack.c.b16 %v344, %v343
  %v464 = vpack.c.b16 %v346, %v345
  %v465 = vpack.c.b16 %v348, %v347
  %v466 = vpack.c.b16 %v350, %v349
  %v467 = vpack.c.b16 %v352, %v351
  %v468 = vpack.c.b16 %v354, %v353
  %v469 = vpack.c.b16 %v356, %v355
  %v470 = vpack.c.b16 %v358, %v357
  %v471 = vpack.c.b16 %v360, %v359
  %v472 = vpack.c.b16 %v362, %v361
  %v473 = vpack.c.b16 %v364, %v363
  %v474 = vpack.c.b16 %v366, %v365
  %v475 = vpack.c.b16 %v368, %v367
  %v476 = vpack.c.b16 %v370, %v369
  %v477 = vpack.c.b16 %v372, %v371
  %v478 = vpack.c.b16 %v374, %v373
  %v479 = vpack.c.b16 %v376, %v375
  %v480 = vpack.c.b16 %v378, %v377
  %v481 = vpack.c.b16 %v380, %v379
  %v482 = vpack.c.b16 %v382, %v381
  %v483 = vpack.c.b16 %v384, %v383
  %v484 = vpack.c.b16 %v386, %v385
  %v485 = vpack.c.b16 %v388, %v387
  %v486 = vpack.c.b16 %v390, %v389
  %v487 = vpack.c.b16 %v392, %v391
  %v488 = vpack.c.b16 %v394, %v393
  %v489 = vpack.c.b16 %v396, %v395
  %v490 = vpack.c.b16 %v398, %v397
  %v491 = vpack.c.b16 %v400, %v399
  %v492 = vpack.c.b16 %v402, %v401
  %v493 = vpack.c.b16 %v404, %v403
  %v494 = vpack.c.b16 %v406, %v405
  %v495 = vpack.c.b16 %v408, %v407
  %v496 = vpack.c.b16 %v410, %v409
  %v497 = vpack.c.b16 %v412, %v411
  %v498 = vpack.c.b16 %v414, %v413
  %v499 = vpack.c.b16 %v416, %v415
  %v500 = vpack.c.b16 %v418, %v417
  %v501 = vpack.c.b16 %v420, %v419
  %v502 = vpack.c.b16 %v422, %v421
  %v503 = vpack.c.b16 %v424, %v423
  %v504 = vpack.c.b16 %v426, %v425
  %v505 = vpack.c.b16 %v428, %v427
  %v506 = vpack.c.b16 %v430, %v429
  %v507 = vpack.c.b16 %v432, %v431
  %v508 = vpack.c.b16 %v434, %v433
  %v509 = vpack.c.b16 %v436, %v435
  %v510 = vpack.c.b16 %v438, %v437
  %v511 = vpack.c.b16 %v440, %v439
  %v512 = vpack.c.b16 %v442, %v441
  %v513 = vpack.c.b16 %v444, %v443
  %v514 = vpack.c.b16 %v446, %v445
  %v515 = vpack.c.b16 %v448, %v447
  %v516 = vpack.c.b16 %v450, %v449
  %v517 = vpack.c.b16 %v452, %v451
  %v518 = vpack.c.b16 %v454, %v453
  %583 = vmatprep.subr.bf16.mxu0 0
  %584 = vmatpush1.bf16.msra.mxu0 %v462
  %585 = vmatprep.subr.bf16.mxu0 0
  %586 = vmatpush1.bf16.msra.mxu0 %v461
  %587 = vmatprep.subr.bf16.mxu0 0
  %588 = vmatpush1.bf16.msra.mxu0 %v460
  %589 = vmatprep.subr.bf16.mxu0 0
  %590 = vmatpush1.bf16.msra.mxu0 %v459
  %591 = vmatprep.subr.bf16.mxu0 0
  %592 = vmatpush1.bf16.msra.mxu0 %v458
  %593 = vmatprep.subr.bf16.mxu0 0
  %594 = vmatpush1.bf16.msra.mxu0 %v457
  %595 = vmatprep.subr.bf16.mxu0 0
  %596 = vmatpush1.bf16.msra.mxu0 %v456
  %597 = vmatprep.subr.bf16.mxu0 0
  %598 = vmatpush1.bf16.msra.mxu0 %v455
  %599 = vmatprep.subr.bf16.mxu0 0
  %600 = vmatpush2.bf16.msra.mxu0 %v470
  %601 = vmatprep.subr.bf16.mxu0 0
  %602 = vmatpush2.bf16.msra.mxu0 %v469
  %603 = vmatprep.subr.bf16.mxu0 0
  %604 = vmatpush2.bf16.msra.mxu0 %v468
  %605 = vmatprep.subr.bf16.mxu0 0
  %606 = vmatpush2.bf16.msra.mxu0 %v467
  %607 = vmatprep.subr.bf16.mxu0 0
  %608 = vmatpush2.bf16.msra.mxu0 %v466
  %609 = vmatprep.subr.bf16.mxu0 0
  %610 = vmatpush2.bf16.msra.mxu0 %v465
  %611 = vmatprep.subr.bf16.mxu0 0
  %612 = vmatpush2.bf16.msra.mxu0 %v464
  %613 = vmatprep.subr.bf16.mxu0 0
  %614 = vmatpush2.bf16.msra.mxu0 %v463
  %615 = vmatprep.mubr.bf16.mxu0 %v184
  %616 = vmatmul.mubr.bf16.gmra.mxu0 %v183
  %v617 = vpop.f32.mrf.mxu0
  %v618 = vadd.f32 %v169, %v617
  %v619 = vpop.f32.mrf.mxu0
  %v620 = vpop.f32.mrf.mxu0
  %v621 = vpop.f32.mrf.mxu0
  %622 = vdwg.mxu0
  %623 = vmatprep.subr.bf16.mxu0 0
  %624 = vmatpush1.bf16.msra.mxu0 %v478
  %625 = vmatprep.subr.bf16.mxu0 0
  %626 = vmatpush1.bf16.msra.mxu0 %v477
  %627 = vmatprep.subr.bf16.mxu0 0
  %628 = vmatpush1.bf16.msra.mxu0 %v476
  %629 = vmatprep.subr.bf16.mxu0 0
  %630 = vmatpush1.bf16.msra.mxu0 %v475
  %631 = vmatprep.subr.bf16.mxu0 0
  %632 = vmatpush1.bf16.msra.mxu0 %v474
  %633 = vmatprep.subr.bf16.mxu0 0
  %634 = vmatpush1.bf16.msra.mxu0 %v473
  %635 = vmatprep.subr.bf16.mxu0 0
  %636 = vmatpush1.bf16.msra.mxu0 %v472
  %637 = vmatprep.subr.bf16.mxu0 0
  %638 = vmatpush1.bf16.msra.mxu0 %v471
  %639 = vmatprep.subr.bf16.mxu0 0
  %640 = vmatpush2.bf16.msra.mxu0 %v486
  %641 = vmatprep.subr.bf16.mxu0 0
  %642 = vmatpush2.bf16.msra.mxu0 %v485
  %643 = vmatprep.subr.bf16.mxu0 0
  %644 = vmatpush2.bf16.msra.mxu0 %v484
  %645 = vmatprep.subr.bf16.mxu0 0
  %646 = vmatpush2.bf16.msra.mxu0 %v483
  %647 = vmatprep.subr.bf16.mxu0 0
  %648 = vmatpush2.bf16.msra.mxu0 %v482
  %649 = vmatprep.subr.bf16.mxu0 0
  %650 = vmatpush2.bf16.msra.mxu0 %v481
  %651 = vmatprep.subr.bf16.mxu0 0
  %652 = vmatpush2.bf16.msra.mxu0 %v480
  %653 = vmatprep.subr.bf16.mxu0 0
  %654 = vmatpush2.bf16.msra.mxu0 %v479
  %655 = vmatprep.mubr.bf16.mxu0 %v186
  %656 = vmatmul.mubr.bf16.gmra.mxu0 %v185
  %v657 = vpop.f32.mrf.mxu0
  %v658 = vadd.f32 %v618, %v657
  %v659 = vpop.f32.mrf.mxu0
  %v660 = vpop.f32.mrf.mxu0
  %v661 = vpop.f32.mrf.mxu0
  %662 = vdwg.mxu0
  %663 = vmatprep.subr.bf16.mxu0 0
  %664 = vmatpush1.bf16.msra.mxu0 %v494
  %665 = vmatprep.subr.bf16.mxu0 0
  %666 = vmatpush1.bf16.msra.mxu0 %v493
  %667 = vmatprep.subr.bf16.mxu0 0
  %668 = vmatpush1.bf16.msra.mxu0 %v492
  %669 = vmatprep.subr.bf16.mxu0 0
  %670 = vmatpush1.bf16.msra.mxu0 %v491
  %671 = vmatprep.subr.bf16.mxu0 0
  %672 = vmatpush1.bf16.msra.mxu0 %v490
  %673 = vmatprep.subr.bf16.mxu0 0
  %674 = vmatpush1.bf16.msra.mxu0 %v489
  %675 = vmatprep.subr.bf16.mxu0 0
  %676 = vmatpush1.bf16.msra.mxu0 %v488
  %677 = vmatprep.subr.bf16.mxu0 0
  %678 = vmatpush1.bf16.msra.mxu0 %v487
  %679 = vmatprep.subr.bf16.mxu0 0
  %680 = vmatpush2.bf16.msra.mxu0 %v502
  %681 = vmatprep.subr.bf16.mxu0 0
  %682 = vmatpush2.bf16.msra.mxu0 %v501
  %683 = vmatprep.subr.bf16.mxu0 0
  %684 = vmatpush2.bf16.msra.mxu0 %v500
  %685 = vmatprep.subr.bf16.mxu0 0
  %686 = vmatpush2.bf16.msra.mxu0 %v499
  %687 = vmatprep.subr.bf16.mxu0 0
  %688 = vmatpush2.bf16.msra.mxu0 %v498
  %689 = vmatprep.subr.bf16.mxu0 0
  %690 = vmatpush2.bf16.msra.mxu0 %v497
  %691 = vmatprep.subr.bf16.mxu0 0
  %692 = vmatpush2.bf16.msra.mxu0 %v496
  %693 = vmatprep.subr.bf16.mxu0 0
  %694 = vmatpush2.bf16.msra.mxu0 %v495
  %695 = vmatprep.mubr.bf16.mxu0 %v188
  %696 = vmatmul.mubr.bf16.gmra.mxu0 %v187
  %v697 = vpop.f32.mrf.mxu0
  %v698 = vadd.f32 %v658, %v697
  %v699 = vpop.f32.mrf.mxu0
  %v700 = vpop.f32.mrf.mxu0
  %v701 = vpop.f32.mrf.mxu0
  %702 = vdwg.mxu0
  %703 = vmatprep.subr.bf16.mxu0 0
  %704 = vmatpush1.bf16.msra.mxu0 %v510
  %705 = vmatprep.subr.bf16.mxu0 0
  %706 = vmatpush1.bf16.msra.mxu0 %v509
  %707 = vmatprep.subr.bf16.mxu0 0
  %708 = vmatpush1.bf16.msra.mxu0 %v508
  %709 = vmatprep.subr.bf16.mxu0 0
  %710 = vmatpush1.bf16.msra.mxu0 %v507
  %711 = vmatprep.subr.bf16.mxu0 0
  %712 = vmatpush1.bf16.msra.mxu0 %v506
  %713 = vmatprep.subr.bf16.mxu0 0
  %714 = vmatpush1.bf16.msra.mxu0 %v505
  %715 = vmatprep.subr.bf16.mxu0 0
  %716 = vmatpush1.bf16.msra.mxu0 %v504
  %717 = vmatprep.subr.bf16.mxu0 0
  %718 = vmatpush1.bf16.msra.mxu0 %v503
  %719 = vmatprep.subr.bf16.mxu0 0
  %720 = vmatpush2.bf16.msra.mxu0 %v518
  %721 = vmatprep.subr.bf16.mxu0 0
  %722 = vmatpush2.bf16.msra.mxu0 %v517
  %723 = vmatprep.subr.bf16.mxu0 0
  %724 = vmatpush2.bf16.msra.mxu0 %v516
  %725 = vmatprep.subr.bf16.mxu0 0
  %726 = vmatpush2.bf16.msra.mxu0 %v515
  %727 = vmatprep.subr.bf16.mxu0 0
  %728 = vmatpush2.bf16.msra.mxu0 %v514
  %729 = vmatprep.subr.bf16.mxu0 0
  %730 = vmatpush2.bf16.msra.mxu0 %v513
  %731 = vmatprep.subr.bf16.mxu0 0
  %732 = vmatpush2.bf16.msra.mxu0 %v512
  %733 = vmatprep.subr.bf16.mxu0 0
  %734 = vmatpush2.bf16.msra.mxu0 %v511
  %735 = vmatprep.mubr.bf16.mxu0 %v190
  %736 = vmatmul.mubr.bf16.gmra.mxu0 %v189
  %v737 = vpop.f32.mrf.mxu0
  %v738 = vadd.f32 %v698, %v737
  %v739 = vpop.f32.mrf.mxu0
  %v740 = vpop.f32.mrf.mxu0
  %v741 = vpop.f32.mrf.mxu0
  %742 = vdwg.mxu0
  %v743 = vmax.f32 %v738, 0.0
  %v744 = vpack.c.bf16 %v743, %v743
  %v745 = vld [vmem:[%s3] sm:$0xf]
  %v746 = vld [vmem:[%s3 + $0x4] sm:$0xf]
  %v747 = vld [vmem:[%s3 + $0x8] sm:$0xf]
  %v748 = vld [vmem:[%s3 + $0xc] sm:$0xf]
  %v749 = vld [vmem:[%s5] sm:$0x1]
  %v751 = vlaneseq
  %v752 = vshrl.u32 %v751, 7
  %v753 = vsub.s32 0, %v752
  %v754 = vrot.slane %v749, %v753
  %v760 = vunpack.c.l.b16 %v745
  %v761 = vunpack.c.l.b16 %v746
  %v762 = vunpack.c.l.b16 %v747
  %v763 = vunpack.c.l.b16 %v748
  %v764 = vpack.c.b16 %v761, %v760
  %v765 = vpack.c.b16 %v763, %v762
  %vm768 = vcmask 261120
  %v770 = vsel %vm768, %v744, 0
  %772 = vmatprep.subr.bf16.mxu0 0
  %773 = vmatpush1.bf16.msra.mxu0 0
  %774 = vmatprep.subr.bf16.mxu0 0
  %775 = vmatpush1.bf16.msra.mxu0 0
  %776 = vmatprep.subr.bf16.mxu0 0
  %777 = vmatpush1.bf16.msra.mxu0 0
  %778 = vmatprep.subr.bf16.mxu0 0
  %779 = vmatpush1.bf16.msra.mxu0 0
  %780 = vmatprep.subr.bf16.mxu0 0
  %781 = vmatpush1.bf16.msra.mxu0 0
  %782 = vmatprep.subr.bf16.mxu0 0
  %783 = vmatpush1.bf16.msra.mxu0 0
  %784 = vmatprep.subr.bf16.mxu0 0
  %785 = vmatpush1.bf16.msra.mxu0 %v765
  %786 = vmatprep.subr.bf16.mxu0 0
  %787 = vmatpush1.bf16.msra.mxu0 %v764
  %788 = vmatprep.subr.bf16.mxu0 0
  %789 = vmatpush2.bf16.msra.mxu0 0
  %790 = vmatprep.subr.bf16.mxu0 0
  %791 = vmatpush2.bf16.msra.mxu0 0
  %792 = vmatprep.subr.bf16.mxu0 0
  %793 = vmatpush2.bf16.msra.mxu0 0
  %794 = vmatprep.subr.bf16.mxu0 0
  %795 = vmatpush2.bf16.msra.mxu0 0
  %796 = vmatprep.subr.bf16.mxu0 0
  %797 = vmatpush2.bf16.msra.mxu0 0
  %798 = vmatprep.subr.bf16.mxu0 0
  %799 = vmatpush2.bf16.msra.mxu0 0
  %800 = vmatprep.subr.bf16.mxu0 0
  %801 = vmatpush2.bf16.msra.mxu0 0
  %802 = vmatprep.subr.bf16.mxu0 0
  %803 = vmatpush2.bf16.msra.mxu0 0
  %804 = vmatprep.mubr.bf16.mxu0 0
  %805 = vmatmul.mubr.bf16.gmra.mxu0 %v770
  %v806 = vpop.f32.mrf.mxu0
  %v807 = vadd.f32 %v754, %v806
  %v808 = vpop.f32.mrf.mxu0
  %v809 = vpop.f32.mrf.mxu0
  %v810 = vpop.f32.mrf.mxu0
  %811 = vdwg.mxu0
  %v812 = vld [vmem:[%s4] sm:$0x1]
  %v814 = vlaneseq
  %v815 = vshrl.u32 %v814, 7
  %v816 = vsub.s32 0, %v815
  %v817 = vrot.slane %v812, %v816
  %v819 = vadd.f32 %v807, %v817
  %v820 = vmax.f32 %v819, 0.0
  %v821 = vmax.f32 %v807, 0.0
  %v822 = vld [vmem:[%s6] sm:$0x1]
  %v824 = vlaneseq
  %v825 = vshrl.u32 %v824, 7
  %v826 = vsub.s32 0, %v825
  %v827 = vrot.slane %v822, %v826
  %v829 = vmul.f32 %v820, %v827
  %vm830 = vcmask 130048
  %v831 = vsel %vm830, %v829, 0.0
  %832 = vadd.xlane.f32.xlu0 %v831
  %v833 = vpop.xlane.xlu0 %832
  %v834 = vld [vmem:[#allocation2] sm:$0x1]
  %v836 = vlaneseq
  %v837 = vshrl.u32 %v836, 7
  %v838 = vsub.s32 0, %v837
  %v839 = vrot.slane %v834, %v838
  %v841 = vadd.f32 %v833, %v839
  %v842 = vmul.f32 %v821, %v827
  %v843 = vsel %vm830, %v842, 0.0
  %844 = vadd.xlane.f32.xlu0 %v843
  %v845 = vpop.xlane.xlu0 %844
  %v846 = vadd.f32 %v845, %v839
  %v847 = vlaneseq
  %v848 = vand.u32 %v847, 127
  %vm849 = vcmp.eq.s32.totalorder %v848, 0
  %v850 = vxor.u32 %v841, 2147483648
  %v851 = vmul.f32 %v850, 1.442695
  %v852 = vpow.pop %v851
  %v853 = vadd.f32 %v852, 1.0
  %v854 = vrcp.pop %v853
  %v855 = vmul.f32 1.0, %v854
  %v856 = vxor.u32 %v846, 2147483648
  %v857 = vmul.f32 %v856, 1.442695
  %v858 = vpow.pop %v857
  %v859 = vadd.f32 %v858, 1.0
  %v860 = vrcp.pop %v859
  %v861 = vmul.f32 1.0, %v860
  %863 = vset.pattern.permute.xlu0 0
  %864 = vperm.xlu0 %863, %v855
  %v865 = vpop.permute.xlu0 %864
  %868 = vset.pattern.permute.xlu0 0
  %869 = vperm.xlu0 %868, %v861
  %v870 = vpop.permute.xlu0 %869
  %v872 = vsel %vm849, %v865, %v870
  %vm873 = vcmask 15360
  %874 = vst.msk [vmem:[%s8] sm:$0xff] %vm873, %v872
  // Predicated region
  $region34: #{tpu_custom_call.1} parent=0 // pred_check
    _
  $region35: #{tpu_custom_call.1} parent=0 // pred_check_branch
    %876 = sbr.rel (0) target = $region37
  $region36: #{tpu_custom_call.1} parent=0 // pred_region
    _
  $region37: #{tpu_custom_call.1} parent=0 // pred_fallthru
    _
  // Predicated region
  $region38: #{tpu_custom_call.1} parent=0 // pred_check
    _
  $region39: #{tpu_custom_call.1} parent=0 // pred_check_branch
    %878 = sbr.rel (0) target = $region41
  $region40: #{tpu_custom_call.1} parent=0 // pred_region
    _
  $region41: #{tpu_custom_call.1} parent=0 // pred_fallthru
    _

</llo_original>
